<compile_context>
chip_gen: v5e
topology: v5e:2x2
jax: 0.10.0
libtpu: 0.0.40
codegen_flags: <defaults>
</compile_context>

<pallas_src>
import math

import jax
import jax.numpy as jnp
import numpy as np
from jax import lax
from jax.experimental import pallas as pl
from jax.experimental.pallas import tpu as pltpu

OUT_H, OUT_W = 8, 3
OUT_HW = OUT_H * OUT_W


def _round_up(x: int, m: int) -> int:
    return ((x + m - 1) // m) * m


def _adaptive_pool_matrix(in_size: int, out_size: int) -> np.ndarray:
    """Row-stochastic (out_size, in_size) matrix replicating adaptive_avg_pool1d."""
    mat = np.zeros((out_size, in_size), dtype=np.float32)
    for i in range(out_size):
        start = (i * in_size) // out_size
        end = int(math.ceil((i + 1) * in_size / out_size))
        mat[i, start:end] = 1.0 / (end - start)
    return mat


def _combined_pool_matrix_t(H: int, W: int) -> np.ndarray:
    """(24, H*W) lane-dense matrix: P[oh*3+ow, h*W+w] = ph[oh,h] * pw[ow,w]."""
    ph = _adaptive_pool_matrix(H, OUT_H)  # (8, H)
    pw = _adaptive_pool_matrix(W, OUT_W)  # (3, W)
    return np.kron(ph, pw).astype(np.float32)  # (24, H*W)


def _weight_cam_kernel(grad_ref, feat_ref, pct_ref, out_ref):
    # Blocks: grad/feat (bt, C, S); pct (24, S); out (bt, 1, 24).
    g = grad_ref[...].astype(jnp.float32)
    f = feat_ref[...].astype(jnp.float32)

    # weight = mean over spatial (lane) axis -> (bt, C, 1)
    wvec = jnp.mean(g, axis=-1, keepdims=True)

    # cam = relu(sum_c feature * weight) -> (bt, S); sublane reduce over C.
    cam = jnp.maximum(jnp.sum(f * wvec, axis=1), 0.0)

    # adaptive_avg_pool2d(., (8,3)) folded into one MXU matmul against the
    # transposed (lane-dense) pool matrix: pooled[b,o] = sum_s cam[b,s]*pct[o,s]
    pooled = lax.dot_general(
        cam, pct_ref[...],
        dimension_numbers=(((1,), (1,)), ((), ())),
        preferred_element_type=jnp.float32)                 # (bt, 24)
    out_ref[...] = pooled.reshape(out_ref.shape).astype(out_ref.dtype)


def _vmem_capacity_bytes() -> int:
    try:
        return int(pltpu.get_tpu_info().vmem_capacity_bytes)
    except Exception:
        return 64 << 20  # conservative fallback (v7x per-TC VMEM)


def _pick_tiling(B: int, C: int, S: int, in_itemsize: int):
    """Batch tile + vmem limit from padded-dim, generation-aware accounting."""
    vmem_cap = _vmem_capacity_bytes()
    Cp = _round_up(max(C, 1), 8)
    Sp = _round_up(max(S, 1), 128)

    # Streaming working set per batch row: 2 inputs x 2 pipeline buffers on
    # (8,128)-padded tiles.
    per_row = 4 * Cp * Sp * in_itemsize
    # Resident bytes: pool matrix (2 buffers, lane-dense) + small out/scratch.
    fixed = 2 * _round_up(OUT_HW, 8) * Sp * 4 + (2 << 20)

    budget = vmem_cap // 2                    # ~32 MiB v7x, ~64 MiB v5e/v6e
    bt = max(1, (budget - fixed) // per_row)
    if B >= 2:
        bt = min(bt, pl.cdiv(B, 2))           # >= 2 grid steps for v7x megacore
    bt = int(min(bt, B))

    working = per_row * bt
    vmem_limit = max(vmem_cap * 3 // 4, working + fixed + (4 << 20))
    vmem_limit = int(min(vmem_limit, vmem_cap - (4 << 20)))
    return bt, vmem_limit


def weight_cam(feature: jax.Array, gradient: jax.Array) -> jax.Array:
    """feature, gradient: (B, C, H, W) float32/bfloat16 -> (B, 8, 3) float32."""
    assert feature.shape == gradient.shape
    B, C, H, W = feature.shape
    S = H * W

    # Lane-dense layout: contiguous (free) reshape done outside the kernel.
    feat2 = feature.reshape(B, C, S)
    grad2 = gradient.reshape(B, C, S)
    pct = jnp.asarray(_combined_pool_matrix_t(H, W))  # (24, S)

    in_itemsize = jnp.dtype(feature.dtype).itemsize
    bt, vmem_limit = _pick_tiling(B, C, S, in_itemsize)
    grid = (pl.cdiv(B, bt),)

    grid_spec = pltpu.PrefetchScalarGridSpec(
        num_scalar_prefetch=0,
        grid=grid,
        in_specs=[
            pl.BlockSpec((bt, C, S), lambda b: (b, 0, 0)),   # gradient
            pl.BlockSpec((bt, C, S), lambda b: (b, 0, 0)),   # feature
            pl.BlockSpec((OUT_HW, S), lambda b: (0, 0)),     # pool matrix (T)
        ],
        # (bt, 1, 24): bt on a leading dim, so any bt (incl. < 8 and partial
        # final tiles) satisfies the (8,128) rule on the last two dims.
        out_specs=pl.BlockSpec((bt, 1, OUT_HW), lambda b: (b, 0, 0)),
    )

    cost = pl.CostEstimate(
        flops=3 * B * C * S + 2 * B * S * OUT_HW,
        transcendentals=0,
        bytes_accessed=2 * B * C * S * in_itemsize + B * OUT_HW * 4 + OUT_HW * S * 4,
    )

    out = pl.pallas_call(
        _weight_cam_kernel,
        out_shape=jax.ShapeDtypeStruct((B, 1, OUT_HW), jnp.float32),
        grid_spec=grid_spec,
        compiler_params=pltpu.CompilerParams(
            dimension_semantics=("parallel",),
            vmem_limit_bytes=vmem_limit,
        ),
        cost_estimate=cost,
    )(grad2, feat2, pct)

    # Free reshape of the lane-contiguous (B, 1, 24) slab to the module's (B, 8, 3).
    return out.reshape(B, OUT_H, OUT_W)


def _weight_cam_ref(feature, gradient):
    weight = jnp.mean(gradient, axis=(2, 3))                    # (B, C)
    cam = feature * weight[:, :, None, None]
    cam = jnp.sum(cam, axis=1)                                  # (B, H, W)
    cam = jnp.maximum(cam, 0.0)
    B, H, W = cam.shape
    ph = jnp.asarray(_adaptive_pool_matrix(H, OUT_H))           # (8, H)
    pw = jnp.asarray(_adaptive_pool_matrix(W, OUT_W)).T         # (W, 3)
    return jnp.einsum("oh,bhw,wt->bot", ph, cam, pw)


if __name__ == "__main__":
    key = jax.random.PRNGKey(0)

    def run_case(B, C, H, W, dtype):
        case_key = jax.random.fold_in(key, B * 100000 + C * 1000 + H * 10 + W)
        kf, kg = jax.random.split(case_key)
        feature = jax.random.normal(kf, (B, C, H, W), dtype=jnp.float32).astype(dtype)
        gradient = jax.random.normal(kg, (B, C, H, W), dtype=jnp.float32).astype(dtype)

        out = jax.block_until_ready(weight_cam(feature, gradient))
        ref = _weight_cam_ref(feature.astype(jnp.float32),
                              gradient.astype(jnp.float32))
        np.testing.assert_allclose(np.asarray(out), np.asarray(ref),
                                   rtol=1e-5, atol=1e-5)

    # Primary small case (f32): B=2 -> bt=1, grid=(2,) (2 parallel steps).
    run_case(2, 4, 16, 16, jnp.float32)
    # Non-divisible batch (B % bt != 0) and S=49 (not a 128 multiple): locks in
    # partial-tile edge-padding behavior.
    run_case(5, 4, 7, 7, jnp.float32)
    # bf16 inputs, f32 in-kernel accumulation.
    run_case(3, 4, 16, 16, jnp.bfloat16)

    print("KERNEL_OK")
</pallas_src>

<mosaic_0001>
module attributes {stable_mosaic.version = 11 : i64} {
  func.func @_weight_cam_kernel(%arg0: i32, %arg1: memref<1x4x256xf32, #tpu.memory_space<vmem>>, %arg2: memref<1x4x256xf32, #tpu.memory_space<vmem>>, %arg3: memref<24x256xf32, #tpu.memory_space<vmem>>, %arg4: memref<1x1x24xf32, #tpu.memory_space<vmem>>) attributes {dimension_semantics = [#tpu.dimension_semantics<parallel>], iteration_bounds = array<i64: 2>, scalar_prefetch = 0 : i64, scratch_operands = 0 : i64, tpu.core_type = #tpu.core_type<tc>, window_params = [{transform_indices = @transform_0, window_bounds = array<i64: 1, 4, 256>}, {transform_indices = @transform_1, window_bounds = array<i64: 1, 4, 256>}, {pipeline_mode = #tpu.pipeline_mode<synchronous>, transform_indices = @transform_2, window_bounds = array<i64: 24, 256>}, {transform_indices = @transform_3, window_bounds = array<i64: 1, 1, 24>}]} {
    %c0 = arith.constant 0 : index
    %c0_0 = arith.constant 0 : index
    %c0_1 = arith.constant 0 : index
    %0 = vector.load %arg1[%c0, %c0_0, %c0_1] : memref<1x4x256xf32, #tpu.memory_space<vmem>>, vector<1x4x256xf32>
    %c0_2 = arith.constant 0 : index
    %c0_3 = arith.constant 0 : index
    %c0_4 = arith.constant 0 : index
    %1 = vector.load %arg2[%c0_2, %c0_3, %c0_4] : memref<1x4x256xf32, #tpu.memory_space<vmem>>, vector<1x4x256xf32>
    %cst = arith.constant dense<0.000000e+00> : vector<1x4xf32>
    %2 = vector.multi_reduction <add>, %0, %cst [2] : vector<1x4x256xf32> to vector<1x4xf32>
    %3 = vector.shape_cast %2 : vector<1x4xf32> to vector<1x4x1xf32>
    %cst_5 = arith.constant 2.560000e+02 : f32
    %4 = vector.broadcast %cst_5 : f32 to vector<1x4x1xf32>
    %5 = arith.divf %3, %4 : vector<1x4x1xf32>
    %6 = vector.broadcast %5 : vector<1x4x1xf32> to vector<1x4x256xf32>
    %7 = arith.mulf %1, %6 : vector<1x4x256xf32>
    %cst_6 = arith.constant dense<0.000000e+00> : vector<1x256xf32>
    %8 = vector.multi_reduction <add>, %7, %cst_6 [1] : vector<1x4x256xf32> to vector<1x256xf32>
    %cst_7 = arith.constant 0.000000e+00 : f32
    %9 = vector.broadcast %cst_7 : f32 to vector<1x256xf32>
    %10 = arith.maximumf %8, %9 : vector<1x256xf32>
    %c0_8 = arith.constant 0 : index
    %c0_9 = arith.constant 0 : index
    %11 = vector.load %arg3[%c0_8, %c0_9] : memref<24x256xf32, #tpu.memory_space<vmem>>, vector<24x256xf32>
    %cst_10 = arith.constant dense<0.000000e+00> : vector<1x24xf32>
    %12 = tpu.matmul %10, %11, %cst_10 {dimension_numbers = #tpu.dot_dimension_numbers<[1], [1], [0], [0], [0, 0, 1, 0], [], []>} : vector<1x256xf32>, vector<24x256xf32>, vector<1x24xf32> -> vector<1x24xf32>
    %13 = vector.shape_cast %12 : vector<1x24xf32> to vector<1x1x24xf32>
    %c0_11 = arith.constant 0 : index
    %c0_12 = arith.constant 0 : index
    %c0_13 = arith.constant 0 : index
    %14 = vector.load %arg4[%c0_11, %c0_12, %c0_13] : memref<1x1x24xf32, #tpu.memory_space<vmem>>, vector<1x1x24xf32>
    tpu.vector_store %arg4[%c0_11, %c0_12, %c0_13], %13 {strides = array<i32>} : memref<1x1x24xf32, #tpu.memory_space<vmem>>, vector<1x1x24xf32>,
    return
  }
  func.func @transform_0(%arg0: i32) -> (i32, i32, i32) {
    %c0_i32 = arith.constant 0 : i32
    %c0_i32_0 = arith.constant 0 : i32
    %c0_i32_1 = arith.constant 0 : i32
    return %arg0, %c0_i32, %c0_i32_0 : i32, i32, i32
  }
  func.func @transform_1(%arg0: i32) -> (i32, i32, i32) {
    %c0_i32 = arith.constant 0 : i32
    %c0_i32_0 = arith.constant 0 : i32
    %c0_i32_1 = arith.constant 0 : i32
    return %arg0, %c0_i32, %c0_i32_0 : i32, i32, i32
  }
  func.func @transform_2(%arg0: i32) -> (i32, i32) {
    %c0_i32 = arith.constant 0 : i32
    %c0_i32_0 = arith.constant 0 : i32
    %c0_i32_1 = arith.constant 0 : i32
    return %c0_i32, %c0_i32_0 : i32, i32
  }
  func.func @transform_3(%arg0: i32) -> (i32, i32, i32) {
    %c0_i32 = arith.constant 0 : i32
    %c0_i32_0 = arith.constant 0 : i32
    %c0_i32_1 = arith.constant 0 : i32
    return %arg0, %c0_i32, %c0_i32_0 : i32, i32, i32
  }
}

</mosaic_0001>

<llo_original>
// kernel: tpu_custom_call.1
$region0: #{tpu_custom_call.1}
  #allocation0 [shape = 'u32[]', space=smem, size = 0x4, offset = 0x4, fixed_abs, tag = 'smem constant byte address 0x4 - core index']
  #allocation1 [shape = 'u32[72,128]{1,0:T(1,128)}', space=vmem, size = 0x9000, scoped, tag = 'internal scratch']
  %s0 = inlined_call_operand.hbm [shape: f32[2,4,256], index: 0, kind: input, shape index: {}]
  %s1 = inlined_call_operand.hbm [shape: f32[2,4,256], index: 1, kind: input, shape index: {}]
  %s2 = inlined_call_operand.hbm [shape: f32[24,256], index: 2, kind: input, shape index: {}]
  %s3 = inlined_call_operand.hbm [shape: f32[2,1,24], index: 3, kind: output, shape index: {}]
  %s4 = sld [smem:[#allocation0]]
  $region57: #{tpu_custom_call.1} parent=0
    _
  %s6 = ssub.s32 1, %s4
  %s7 = scalar_select 0, %s6, %s4
  $region1: #{tpu_custom_call.1} parent=0
    #allocation2 [shape = 'u8[8192]{0}', space=vmem, size = 0x2000, scoped, tag = 'input window, operand 0']
    #allocation3 [shape = 's32[2]{0}', space=sflag, size = 0x8, scoped, tag = 'scoped memory for tpu_custom_call.1']
    #allocation4 [shape = 's32[2]{0}', space=sflag, size = 0x8, scoped, tag = 'scoped memory for tpu_custom_call.1']
    #allocation5 [shape = 'u8[8192]{0}', space=vmem, size = 0x2000, scoped, tag = 'input window, operand 1']
    #allocation6 [shape = 's32[2]{0}', space=sflag, size = 0x8, scoped, tag = 'scoped memory for tpu_custom_call.1']
    #allocation7 [shape = 'u8[24576]{0}', space=vmem, size = 0x6000, scoped, tag = 'input window, operand 2, single buffered']
    #allocation8 [shape = 'u8[1024]{0}', space=vmem, size = 0x400, scoped, tag = 'output window, operand 0']
    %8 = vsyncpa [#allocation3], 0
    %s9 = scalar_lea.sflag [#allocation3], 1
    %10 = vsyncpa %s9, 0
    %11 = vsyncpa [#allocation6], 0
    %s12 = scalar_lea.sflag [#allocation6], 1
    %13 = vsyncpa %s12, 0
    %14 = vsyncpa [#allocation4], 0
    %s15 = scalar_lea.sflag [#allocation4], 1
    %16 = vsyncpa %s15, 0
    loop: start=0, step=1, limit=4
    $region2: #{tpu_custom_call.1} parent=1 // loop_pre_header
      _
    $region3: #{tpu_custom_call.1} parent=1 // loop_header
      %s18 = sphi 0, %s22
      %p19 = scmp.ge.s32.totalorder %s18, 4
      %s28 = sphi 0, %s30
      %s31 = sphi 0, %s28
      %s32 = sphi 0, %s31
      %s48 = sphi 0, %s32
      %s54 = sphi 0, %s56
      %s57 = sphi 0, %s54
      %s58 = sphi 0, %s57
      %s74 = sphi 0, %s58
      %s78 = sphi 0, %s78
      %s80 = sphi 0, %s78
      %s81 = sphi 0, %s80
      %s95 = sphi 0, %s81
      %s101 = sphi 0, %s103
      %s104 = sphi 0, %s101
      %s105 = sphi 0, %s104
      %s121 = sphi 0, %s105
    $region4: #{tpu_custom_call.1} parent=1 // loop_header_branch
      %21 = sbr.rel (%p19) target = $region8
    $region5: #{tpu_custom_call.1} parent=1 // loop_body
      %s23 = ssub.s32 %s18, 1
      %s24 = ssub.s32 %s18, 2
      %s25 = sadd.s32 %s18, 1
      %s26 = ssub.s32 %s18, %s25
      %p27 = scmp.eq.s32.totalorder %s26, 0
      %s29 = sadd.s32 %s28, 1
      %s30 = scalar_select %p27, %s28, %s29
      %p33 = pneg %p27
      %p34 = scmp.eq.s32.totalorder %s18, 1
      %p35 = por %p33, %p34
      %p36 = scmp.ne.s32.totalorder %s28, %s31
      %p37 = scmp.eq.s32.totalorder %s18, 0
      %p38 = por %p36, %p37
      %p39 = scmp.ne.s32.totalorder %s28, %s31
      %p40 = scmp.eq.s32.totalorder %s23, 1
      %p41 = por %p39, %p40
      %p42 = scmp.ne.s32.totalorder %s31, %s32
      %p43 = scmp.eq.s32.totalorder %s23, 0
      %p44 = por %p42, %p43
      %p45 = scmp.ne.s32.totalorder %s31, %s32
      %p46 = scmp.eq.s32.totalorder %s24, 1
      %p47 = por %p45, %p46
      %p49 = scmp.ne.s32.totalorder %s32, %s48
      %p50 = scmp.eq.s32.totalorder %s24, 0
      %p51 = por %p49, %p50
      %s52 = ssub.s32 %s18, %s25
      %p53 = scmp.eq.s32.totalorder %s52, 0
      %s55 = sadd.s32 %s54, 1
      %s56 = scalar_select %p53, %s54, %s55
      %p59 = pneg %p53
      %p60 = scmp.eq.s32.totalorder %s18, 1
      %p61 = por %p59, %p60
      %p62 = scmp.ne.s32.totalorder %s54, %s57
      %p63 = scmp.eq.s32.totalorder %s18, 0
      %p64 = por %p62, %p63
      %p65 = scmp.ne.s32.totalorder %s54, %s57
      %p66 = scmp.eq.s32.totalorder %s23, 1
      %p67 = por %p65, %p66
      %p68 = scmp.ne.s32.totalorder %s57, %s58
      %p69 = scmp.eq.s32.totalorder %s23, 0
      %p70 = por %p68, %p69
      %p71 = scmp.ne.s32.totalorder %s57, %s58
      %p72 = scmp.eq.s32.totalorder %s24, 1
      %p73 = por %p71, %p72
      %p75 = scmp.ne.s32.totalorder %s58, %s74
      %p76 = scmp.eq.s32.totalorder %s24, 0
      %p77 = por %p75, %p76
      %s79 = sadd.s32 %s78, 1
      %p82 = scmp.eq.s32.totalorder %s18, 1
      %p83 = scmp.ne.s32.totalorder %s78, %s80
      %p84 = scmp.eq.s32.totalorder %s18, 0
      %p85 = por %p83, %p84
      %p86 = scmp.ne.s32.totalorder %s78, %s80
      %p87 = scmp.eq.s32.totalorder %s23, 1
      %p88 = por %p86, %p87
      %p89 = scmp.ne.s32.totalorder %s80, %s81
      %p90 = scmp.eq.s32.totalorder %s23, 0
      %p91 = por %p89, %p90
      %p92 = scmp.ne.s32.totalorder %s80, %s81
      %p93 = scmp.eq.s32.totalorder %s24, 1
      %p94 = por %p92, %p93
      %p96 = scmp.ne.s32.totalorder %s81, %s95
      %p97 = scmp.eq.s32.totalorder %s24, 0
      %p98 = por %p96, %p97
      %s99 = ssub.s32 %s18, %s25
      %p100 = scmp.eq.s32.totalorder %s99, 0
      %s102 = sadd.s32 %s101, 1
      %s103 = scalar_select %p100, %s101, %s102
      %p106 = pneg %p100
      %p107 = scmp.eq.s32.totalorder %s18, 1
      %p108 = por %p106, %p107
      %p109 = scmp.ne.s32.totalorder %s101, %s104
      %p110 = scmp.eq.s32.totalorder %s18, 0
      %p111 = por %p109, %p110
      %p112 = scmp.ne.s32.totalorder %s101, %s104
      %p113 = scmp.eq.s32.totalorder %s23, 1
      %p114 = por %p112, %p113
      %p115 = scmp.ne.s32.totalorder %s104, %s105
      %p116 = scmp.eq.s32.totalorder %s23, 0
      %p117 = por %p115, %p116
      %p118 = scmp.ne.s32.totalorder %s104, %s105
      %p119 = scmp.eq.s32.totalorder %s24, 1
      %p120 = por %p118, %p119
      %p122 = scmp.ne.s32.totalorder %s105, %s121
      %p123 = scmp.eq.s32.totalorder %s24, 0
      %p124 = por %p122, %p123
      %p125 = scmp.le.s32.totalorder 1, %s18
      %p126 = scmp.lt.s32.totalorder %s18, 3
      %p127 = pnand %p125, %p126
      %p128 = pneg %p127
      // Predicated region
      $region9: #{tpu_custom_call.1} parent=5 // pred_check
        _
      $region10: #{tpu_custom_call.1} parent=5 // pred_check_branch
        %130 = sbr.rel (%p127) target = $region12
      $region11: #{tpu_custom_call.1} parent=5 // pred_region
        %s131 = ssub.s32 %s18, 1
        // Predicated region
        $region13: #{tpu_custom_call.1} parent=11 // pred_check
          %p132 = pneg %p91
        $region14: #{tpu_custom_call.1} parent=11 // pred_check_branch
          %134 = sbr.rel (%p132) target = $region16
        $region15: #{tpu_custom_call.1} parent=11 // pred_region
          %136 = vsyncadd [#allocation6], 0
          %s137 = sshll.u32 %s2, 4
          %s138 = int_to_ptr.hbm [resolvable:$true] %s137
          %s139 = sshll.u32 [#allocation7], 4
          %s140 = int_to_ptr.vmem [resolvable:$true] %s139
          %145 = dma.hbm_to_vmem [thread:$0]  %s138, 768, %s140, [#allocation6], 256, 256, 16
        $region16: #{tpu_custom_call.1} parent=11 // pred_fallthru
          _
      $region12: #{tpu_custom_call.1} parent=5 // pred_fallthru
        _
      %p146 = scmp.lt.s32.totalorder %s18, 2
      // Predicated region
      $region17: #{tpu_custom_call.1} parent=5 // pred_check
        %p147 = pneg %p146
      $region18: #{tpu_custom_call.1} parent=5 // pred_check_branch
        %149 = sbr.rel (%p147) target = $region20
      $region19: #{tpu_custom_call.1} parent=5 // pred_region
        // Predicated region
        $region21: #{tpu_custom_call.1} parent=19 // pred_check
          %p150 = pneg %p38
        $region22: #{tpu_custom_call.1} parent=19 // pred_check_branch
          %152 = sbr.rel (%p150) target = $region24
        $region23: #{tpu_custom_call.1} parent=19 // pred_region
          %s153 = sand.u32 %s28, 1
          %s154 = scalar_lea.sflag [#allocation3], %s153
          %s155 = sand.u32 %s28, 1
          %s156 = smul.addr %s155, 8
          %s157 = scalar_lea.vmem [#allocation2], %s156
          %159 = vsyncadd %s154, 0
          %s160 = smul.addr %s18, 2
          %s161 = smul.addr %s160, 4
          %s162 = scalar_lea.hbm %s0, %s161
          %s164 = sshll.u32 %s162, 4
          %s165 = int_to_ptr.hbm [resolvable:$true] %s164
          %s166 = sshll.u32 %s157, 4
          %s167 = int_to_ptr.vmem [resolvable:$true] %s166
          %169 = dma.hbm_to_vmem [thread:$0]  %s165, 128, %s167, %s154
        $region24: #{tpu_custom_call.1} parent=19 // pred_fallthru
          _
        // Predicated region
        $region25: #{tpu_custom_call.1} parent=19 // pred_check
          %p170 = pneg %p64
        $region26: #{tpu_custom_call.1} parent=19 // pred_check_branch
          %172 = sbr.rel (%p170) target = $region28
        $region27: #{tpu_custom_call.1} parent=19 // pred_region
          %s173 = sand.u32 %s18, 1
          %s174 = scalar_lea.sflag [#allocation6], %s173
          %s175 = sand.u32 %s54, 1
          %s176 = smul.addr %s175, 8
          %s177 = scalar_lea.vmem [#allocation5], %s176
          %179 = vsyncadd %s174, 0
          %s180 = smul.addr %s18, 2
          %s181 = smul.addr %s180, 4
          %s182 = scalar_lea.hbm %s1, %s181
          %s184 = sshll.u32 %s182, 4
          %s185 = int_to_ptr.hbm [resolvable:$true] %s184
          %s186 = sshll.u32 %s177, 4
          %s187 = int_to_ptr.vmem [resolvable:$true] %s186
          %189 = dma.hbm_to_vmem [thread:$0]  %s185, 128, %s187, %s174
        $region28: #{tpu_custom_call.1} parent=19 // pred_fallthru
          _
      $region20: #{tpu_custom_call.1} parent=5 // pred_fallthru
        _
      %p190 = scmp.le.s32.totalorder 1, %s18
      %p191 = scmp.lt.s32.totalorder %s18, 3
      %p192 = pnand %p190, %p191
      %p193 = pneg %p192
      // Predicated region
      $region29: #{tpu_custom_call.1} parent=5 // pred_check
        _
      $region30: #{tpu_custom_call.1} parent=5 // pred_check_branch
        %195 = sbr.rel (%p192) target = $region32
      $region31: #{tpu_custom_call.1} parent=5 // pred_region
        %s196 = ssub.s32 %s18, 1
        %s197 = sand.u32 %s31, 1
        %s198 = scalar_lea.sflag [#allocation3], %s197
        %s199 = sand.u32 %s31, 1
        %s200 = smul.addr %s199, 8
        %s201 = scalar_lea.vmem [#allocation2], %s200
        // Predicated region
        $region33: #{tpu_custom_call.1} parent=31 // pred_check
          %p202 = pneg %p44
        $region34: #{tpu_custom_call.1} parent=31 // pred_check_branch
          %204 = sbr.rel (%p202) target = $region36
        $region35: #{tpu_custom_call.1} parent=31 // pred_region
          %206 = dma.done %s198, 128
        $region36: #{tpu_custom_call.1} parent=31 // pred_fallthru
          _
        %s207 = sand.u32 %s23, 1
        %s208 = scalar_lea.sflag [#allocation6], %s207
        %s209 = sand.u32 %s57, 1
        %s210 = smul.addr %s209, 8
        %s211 = scalar_lea.vmem [#allocation5], %s210
        // Predicated region
        $region37: #{tpu_custom_call.1} parent=31 // pred_check
          %p212 = pneg %p70
        $region38: #{tpu_custom_call.1} parent=31 // pred_check_branch
          %214 = sbr.rel (%p212) target = $region40
        $region39: #{tpu_custom_call.1} parent=31 // pred_region
          %216 = dma.done %s208, 128
        $region40: #{tpu_custom_call.1} parent=31 // pred_fallthru
          _
        // Predicated region
        $region41: #{tpu_custom_call.1} parent=31 // pred_check
          %p217 = pneg %p91
        $region42: #{tpu_custom_call.1} parent=31 // pred_check_branch
          %219 = sbr.rel (%p217) target = $region44
        $region43: #{tpu_custom_call.1} parent=31 // pred_region
          %221 = dma.done [#allocation6], 768
        $region44: #{tpu_custom_call.1} parent=31 // pred_fallthru
          _
        %s222 = sand.u32 %s31, 1
        %s223 = scalar_lea.sflag [#allocation3], %s222
        %s224 = sand.u32 %s31, 1
        %s225 = smul.addr %s224, 8
        %s226 = scalar_lea.vmem [#allocation2], %s225
        %p227 = pneg %p44
        %p228 = pneg %p41
        %s229 = sand.u32 %s23, 1
        %s230 = scalar_lea.sflag [#allocation6], %s229
        %s231 = sand.u32 %s57, 1
        %s232 = smul.addr %s231, 8
        %s233 = scalar_lea.vmem [#allocation5], %s232
        %p234 = pneg %p70
        %p235 = pneg %p67
        %p236 = pneg %p91
        %p237 = pneg %p88
        %p238 = pneg %p117
        %p239 = pneg %p114
        %s240 = sand.u32 %s104, 1
        %s241 = scalar_lea.sflag [#allocation4], %s240
        %s242 = sand.u32 %s104, 1
        %s243 = scalar_lea.vmem [#allocation8], %s242
        %v244 = vld [vmem:[%s201] sm:$0xff]
        %v245 = vld [vmem:[%s211] sm:$0xff]
        %247 = vst [vmem:[#allocation1] ss:$2 sm:$0xff] %v244
        %v248 = vld.sshfl [vmem:[#allocation1] sm:$0xff pattern:$0x75316420]
        %v249 = vld.sshfl [vmem:[#allocation1 + $0x8] sm:$0xff pattern:$0x75316420]
        %vm252 = vcmask 1043456
        %v253 = vsel %vm252, %v248, 0.0
        %v254 = vsel %vm252, %v249, 0.0
        %v255 = vadd.f32 %v253, %v254
        %256 = vadd.xlane.f32.xlu0 %v255
        %v257 = vpop.xlane.xlu0 %256
        %v258 = vrcp.pop 256.0
        %v259 = vmul.f32 256.0, %v258
        %v260 = vsub.f32 1.0, %v259
        %v261 = vmul.f32 %v258, %v260
        %v262 = vadd.f32 %v258, %v261
        %vm263 = vweird.f32 %v258
        %v264 = vsel %vm263, %v258, %v262
        %v265 = vmul.f32 %v257, %v264
        %v268 = vunpack.c.l.s4 839922192
        %v269 = vunpack.c.0.s8 %v268
        %v270 = vperm.slane %v265, %v269
        %v272 = vmul.f32 %v245, %v270
        %274 = vst [vmem:[#allocation1] ss:$2 sm:$0xff] %v272
        %v275 = vld.sshfl [vmem:[#allocation1] sm:$0xff pattern:$0x75316420]
        %v276 = vld.sshfl [vmem:[#allocation1 + $0x8] sm:$0xff pattern:$0x75316420]
        %v279 = vsel %vm252, %v275, 0.0
        %v280 = vrot.slane %v279, 4
        %v281 = vadd.f32 %v279, %v280
        %v282 = vrot.slane %v281, 2
        %v283 = vadd.f32 %v281, %v282
        %v284 = vrot.slane %v283, 1
        %v285 = vadd.f32 %v283, %v284
        %v286 = vsel %vm252, %v276, 0.0
        %v287 = vrot.slane %v286, 4
        %v288 = vadd.f32 %v286, %v287
        %v289 = vrot.slane %v288, 2
        %v290 = vadd.f32 %v288, %v289
        %v291 = vrot.slane %v290, 1
        %v292 = vadd.f32 %v290, %v291
        %v293 = vmax.f32 %v285, 0.0
        %v294 = vmax.f32 %v292, 0.0
        %v295 = vld [vmem:[#allocation7] sm:$0xff]
        %v296 = vld [vmem:[#allocation7 + $0x8] sm:$0xff]
        %v297 = vld [vmem:[#allocation7 + $0x10] sm:$0xff]
        %v298 = vld [vmem:[#allocation7 + $0x18] sm:$0xff]
        %v299 = vld [vmem:[#allocation7 + $0x20] sm:$0xff]
        %v300 = vld [vmem:[#allocation7 + $0x28] sm:$0xff]
        %301 = vmatpush.xpose.msra.mxu0 0.0
        %302 = vmatpush.xpose.msra.mxu0 0.0
        %303 = vmatpush.xpose.msra.mxu0 0.0
        %304 = vmatpush.xpose.msra.mxu0 0.0
        %305 = vmatpush.xpose.msra.mxu0 0.0
        %306 = vmatpush.xpose.msra.mxu0 0.0
        %307 = vmatpush.xpose.msra.mxu0 0.0
        %308 = vmatpush.xpose.msra.mxu0 0.0
        %309 = vmatpush.xpose.msra.mxu0 0.0
        %310 = vmatpush.xpose.msra.mxu0 0.0
        %311 = vmatpush.xpose.msra.mxu0 0.0
        %312 = vmatpush.xpose.msra.mxu0 0.0
        %313 = vmatpush.xpose.msra.mxu0 0.0
        %314 = vmatpush.xpose.msra.mxu0 %v299
        %315 = vmatpush.xpose.msra.mxu0 %v297
        %316 = vmatpush.xpose.msra.mxu0 %v295
        %317 = vmatmul.f32.gmra.mxu0 %v293
        %v318 = vpop.f32.mrf.mxu0
        %v319 = vadd.f32 0.0, %v318
        %320 = vdwg.mxu0
        %321 = vmatpush.xpose.msra.mxu0 0.0
        %322 = vmatpush.xpose.msra.mxu0 0.0
        %323 = vmatpush.xpose.msra.mxu0 0.0
        %324 = vmatpush.xpose.msra.mxu0 0.0
        %325 = vmatpush.xpose.msra.mxu0 0.0
        %326 = vmatpush.xpose.msra.mxu0 0.0
        %327 = vmatpush.xpose.msra.mxu0 0.0
        %328 = vmatpush.xpose.msra.mxu0 0.0
        %329 = vmatpush.xpose.msra.mxu0 0.0
        %330 = vmatpush.xpose.msra.mxu0 0.0
        %331 = vmatpush.xpose.msra.mxu0 0.0
        %332 = vmatpush.xpose.msra.mxu0 0.0
        %333 = vmatpush.xpose.msra.mxu0 0.0
        %334 = vmatpush.xpose.msra.mxu0 %v300
        %335 = vmatpush.xpose.msra.mxu0 %v298
        %336 = vmatpush.xpose.msra.mxu0 %v296
        %337 = vmatmul.f32.gmra.mxu0 %v294
        %v338 = vpop.f32.mrf.mxu0
        %v339 = vadd.f32 %v319, %v338
        %340 = vdwg.mxu0
        %vm341 = vcmask 188416
        %342 = vst.msk [vmem:[%s243] sm:$0x1] %vm341, %v339
        %s343 = sand.u32 %s104, 1
        %s344 = scalar_lea.sflag [#allocation4], %s343
        %s345 = sand.u32 %s104, 1
        %s346 = scalar_lea.vmem [#allocation8], %s345
        // Predicated region
        $region45: #{tpu_custom_call.1} parent=31 // pred_check
          %p347 = pneg %p114
        $region46: #{tpu_custom_call.1} parent=31 // pred_check_branch
          %349 = sbr.rel (%p347) target = $region48
        $region47: #{tpu_custom_call.1} parent=31 // pred_region
          %351 = vsyncadd %s344, 0
          %s352 = scalar_lea.hbm %s3, %s23
          %s354 = sshll.u32 %s346, 4
          %s355 = int_to_ptr.vmem [resolvable:$true] %s354
          %s356 = sshll.u32 %s352, 4
          %s357 = int_to_ptr.hbm [resolvable:$true] %s356
          %359 = dma.vmem_to_hbm [thread:$0]  %s355, 16, %s357, %s344
        $region48: #{tpu_custom_call.1} parent=31 // pred_fallthru
          _
      $region32: #{tpu_custom_call.1} parent=5 // pred_fallthru
        _
      %p360 = scmp.le.s32.totalorder 2, %s18
      // Predicated region
      $region49: #{tpu_custom_call.1} parent=5 // pred_check
        %p361 = pneg %p360
      $region50: #{tpu_custom_call.1} parent=5 // pred_check_branch
        %363 = sbr.rel (%p361) target = $region52
      $region51: #{tpu_custom_call.1} parent=5 // pred_region
        %s364 = ssub.s32 %s18, 2
        // Predicated region
        $region53: #{tpu_custom_call.1} parent=51 // pred_check
          %p365 = pneg %p120
        $region54: #{tpu_custom_call.1} parent=51 // pred_check_branch
          %367 = sbr.rel (%p365) target = $region56
        $region55: #{tpu_custom_call.1} parent=51 // pred_region
          %s368 = sand.u32 %s105, 1
          %s369 = scalar_lea.sflag [#allocation4], %s368
          %s370 = sand.u32 %s105, 1
          %s371 = scalar_lea.vmem [#allocation8], %s370
          %373 = dma.done %s369, 16
        $region56: #{tpu_custom_call.1} parent=51 // pred_fallthru
          _
      $region52: #{tpu_custom_call.1} parent=5 // pred_fallthru
        _
    $region6: #{tpu_custom_call.1} parent=1 // loop_footer
      %s22 = sadd.s32 1, %s18
    $region7: #{tpu_custom_call.1} parent=1 // loop_footer_branch
      %17 = sbr.rel target = $region3
    $region8: #{tpu_custom_call.1} parent=1 // loop_exit
      _
    %374 = vsyncpa [#allocation3], 1
    %s375 = scalar_lea.sflag [#allocation3], 1
    %376 = vsyncpa %s375, 1
    %377 = vsyncpa [#allocation6], 1
    %s378 = scalar_lea.sflag [#allocation6], 1
    %379 = vsyncpa %s378, 1
    %380 = vsyncpa [#allocation4], 1
    %s381 = scalar_lea.sflag [#allocation4], 1
    %382 = vsyncpa %s381, 1

</llo_original>
